<compile_context>
chip_gen: v6e
topology: v6e:2x2x1
jax: 0.10.0
libtpu: 0.0.40
codegen_flags: <defaults>
</compile_context>

<pallas_src>
import jax
import jax.numpy as jnp
from jax.experimental import pallas as pl
from jax.experimental.pallas import tpu as pltpu

C_OUT_PAD = 128   # lane-dense padded conv-channel dim
H_PAD = 128       # lane-dense padded hidden dim
NC_PAD = 128      # lane-dense padded class dim


def make_kernel(Bpad, Lp, Rpad):
    def kernel(x_ref, wc_ref, bc_ref, w1_ref, b1_ref, w2_ref, b2_ref, out_ref):
        # x_ref  : (2*Rpad, K*C_in)  im2col rows; [0:Rpad] = even conv positions,
        #                            [Rpad:2*Rpad] = odd conv positions, row = b*Lp + p
        # wc_ref : (K*C_in, 128)     conv weight, channels zero-padded to 128 lanes
        # bc_ref : (1, 128)
        # w1_ref : (Lp*128, H_PAD)   fc1 weight, rows re-laid to (position, padded-channel)
        # b1_ref : (1, H_PAD)
        # w2_ref : (H_PAD, NC_PAD)
        # b2_ref : (1, NC_PAD)       padded class lanes hold -1e30 -> softmax zeroes them
        # out_ref: (Bpad, NC_PAD)

        # Conv1d + ReLU for both pooling legs in ONE MXU push.
        conv = jnp.maximum(
            jnp.dot(x_ref[...], wc_ref[...], preferred_element_type=jnp.float32)
            + bc_ref[...], 0.0)                                  # (2*Rpad, 128)

        # MaxPool1d(2): elementwise max of the two 8-aligned row halves.
        pooled = jnp.maximum(conv[:Rpad], conv[Rpad:])           # (Rpad, 128)

        # Flatten to (Bpad, Lp*128): 128-lane-chunk-aligned repack (C_out padded),
        # order (position, channel); W1p rows are pre-permuted to match.
        flat = pooled.reshape(Bpad, Lp * C_OUT_PAD)

        h = jnp.maximum(
            jnp.dot(flat, w1_ref[...], preferred_element_type=jnp.float32)
            + b1_ref[...], 0.0)                                  # (Bpad, H_PAD)
        logits = jnp.dot(h, w2_ref[...],
                         preferred_element_type=jnp.float32) + b2_ref[...]  # (Bpad, NC_PAD)

        # Softmax over lanes; padded class lanes carry -1e30 -> exp underflows to 0.
        m = jnp.max(logits, axis=1, keepdims=True)
        e = jnp.exp(logits - m)
        s = jnp.sum(e, axis=1, keepdims=True)
        inv = pl.reciprocal(s, approx=True)          # EUP slot (free vs VALU divide)
        inv = inv * (2.0 - s * inv)                  # one Newton step -> ~f32 accuracy
        out_ref[...] = e * inv

    return kernel


def prepare_params(Wc, bc, W1, b1, W2, b2):
    """One-time re-layout of the weights for the kernel (hoisted out of forward)."""
    C_out, C_in, K = Wc.shape
    H, F = W1.shape
    NC = W2.shape[0]
    Lp = F // C_out

    # Conv weight (C_out, C_in, K) -> (K*C_in, C_out) matching im2col column order,
    # then zero-pad output channels to 128 lanes.
    wc_mat = jnp.transpose(Wc, (2, 1, 0)).reshape(K * C_in, C_out).astype(jnp.float32)
    wc_mat = jnp.pad(wc_mat, ((0, 0), (0, C_OUT_PAD - C_out)))
    bc2 = jnp.pad(bc.astype(jnp.float32), (0, C_OUT_PAD - C_out)).reshape(1, C_OUT_PAD)

    # W1: PyTorch flatten is (channel, position); kernel flatten is
    # (position, padded-channel).  Re-lay rows accordingly, zero rows for the
    # padded channels, zero-pad H lanes.
    W1p = jnp.transpose(W1.reshape(H, C_out, Lp), (2, 1, 0))          # (Lp, C_out, H)
    W1p = jnp.pad(W1p.astype(jnp.float32),
                  ((0, 0), (0, C_OUT_PAD - C_out), (0, 0)))           # (Lp, 128, H)
    W1p = W1p.reshape(Lp * C_OUT_PAD, H)
    W1p = jnp.pad(W1p, ((0, 0), (0, H_PAD - H)))                      # (Lp*128, H_PAD)
    b1p = jnp.pad(b1.astype(jnp.float32), (0, H_PAD - H)).reshape(1, H_PAD)

    # W2: (NC, H) -> (H_PAD, NC_PAD) zero-padded; padded class lanes get -1e30 bias.
    W2p = jnp.pad(W2.T.astype(jnp.float32), ((0, H_PAD - H), (0, NC_PAD - NC)))
    b2p = jnp.pad(b2.astype(jnp.float32), (0, NC_PAD - NC),
                  constant_values=-1e30).reshape(1, NC_PAD)

    params = (wc_mat, bc2, W1p, b1p, W2p, b2p)
    meta = dict(C_in=C_in, C_out=C_out, K=K, H=H, NC=NC, F=F, Lp=Lp)
    return params, meta


def cnn_dnn_classifier(x_ncl, params, meta):
    """Forward pass matching the PyTorch module.

    x_ncl: (B, C_in, L) float32 (PyTorch NCL layout).  Returns (B, NC) probs.
    Call under jax.jit so the input glue fuses with the Pallas call.
    """
    wc_mat, bc2, W1p, b1p, W2p, b2p = params
    B, C_in, L = x_ncl.shape
    K, C_out, NC, Lp = meta["K"], meta["C_out"], meta["NC"], meta["Lp"]
    L_out = L - K + 1
    assert L_out // 2 == Lp, "input_size inconsistent with fc1 weight shape"

    # Pad batch to a multiple of 8 so every M dim / output tile is sublane-full.
    Bpad = max(8, ((B + 7) // 8) * 8)
    Rpad = Bpad * Lp                      # rows per pooling leg (multiple of 8)

    # Per-call input glue (fused under jit): NCL -> NLC, im2col split directly
    # into the even/odd pooling legs, stacked along rows for one conv matmul.
    x_p = jnp.pad(x_ncl.astype(jnp.float32), ((0, Bpad - B), (0, 0), (0, 0)))
    x_blc = jnp.transpose(x_p, (0, 2, 1))                              # (Bpad, L, C_in)
    cols_e = jnp.concatenate(
        [x_blc[:, k:k + 2 * Lp:2, :] for k in range(K)], axis=-1)      # (Bpad, Lp, K*C_in)
    cols_o = jnp.concatenate(
        [x_blc[:, k + 1:k + 1 + 2 * Lp:2, :] for k in range(K)], axis=-1)
    x_cat = jnp.concatenate(
        [cols_e.reshape(Rpad, K * C_in), cols_o.reshape(Rpad, K * C_in)], axis=0)

    kernel = make_kernel(Bpad, Lp, Rpad)
    vmem = pl.BlockSpec(memory_space=pltpu.MemorySpace.VMEM)
    out = pl.pallas_call(
        kernel,
        out_shape=jax.ShapeDtypeStruct((Bpad, NC_PAD), jnp.float32),
        in_specs=[vmem] * 7,
        out_specs=vmem,
    )(x_cat, wc_mat, bc2, W1p, b1p, W2p, b2p)
    return out[:B, :NC]


def ref_forward(x_ncl, Wc, bc, W1, b1, W2, b2):
    """Pure-JAX reference mirroring the PyTorch forward exactly (NCL layout)."""
    B, C_in, L = x_ncl.shape
    C_out, _, K = Wc.shape
    L_out = L - K + 1
    conv = jnp.zeros((B, C_out, L_out), jnp.float32)
    for k in range(K):
        conv = conv + jnp.einsum('bcl,oc->bol', x_ncl[:, :, k:k + L_out], Wc[:, :, k])
    conv = jnp.maximum(conv + bc[None, :, None], 0.0)
    Lp = L_out // 2
    pooled = jnp.max(conv[:, :, :Lp * 2].reshape(B, C_out, Lp, 2), axis=-1)
    flat = pooled.reshape(B, -1)
    h = jnp.maximum(flat @ W1.T + b1, 0.0)
    logits = h @ W2.T + b2
    m = jnp.max(logits, axis=1, keepdims=True)
    e = jnp.exp(logits - m)
    return e / jnp.sum(e, axis=1, keepdims=True)


if __name__ == "__main__":
    # Hyperparameters implied by the module (conv_kernal_size=3, pooling=2).
    batch = 2
    input_channels = 4
    output_channels = 8          # == dnn_input_size
    conv_kernal_size = 3
    input_size = 16              # sequence length
    dnn_output_size = 32
    num_classes = 5

    Lp = (input_size - 2) // 2
    fc_in = output_channels * Lp

    key = jax.random.PRNGKey(0)
    ks = jax.random.split(key, 8)
    x = jax.random.normal(ks[0], (batch, input_channels, input_size), jnp.float32)
    Wc = jax.random.normal(ks[1], (output_channels, input_channels, conv_kernal_size), jnp.float32) * 0.1
    bc = jax.random.normal(ks[2], (output_channels,), jnp.float32) * 0.1
    W1 = jax.random.normal(ks[3], (dnn_output_size, fc_in), jnp.float32) * 0.1
    b1 = jax.random.normal(ks[4], (dnn_output_size,), jnp.float32) * 0.1
    W2 = jax.random.normal(ks[5], (num_classes, dnn_output_size), jnp.float32) * 0.1
    b2 = jax.random.normal(ks[6], (num_classes,), jnp.float32) * 0.1

    # One-time parameter re-layout (hoisted out of the per-call path).
    params, meta = prepare_params(Wc, bc, W1, b1, W2, b2)
    params = jax.block_until_ready(params)

    # jit the full forward (transpose + im2col + pallas_call + slice) so the
    # glue fuses and there is a single dispatch per call.
    forward = jax.jit(lambda xx: cnn_dnn_classifier(xx, params, meta))

    out = jax.block_until_ready(forward(x))

    ref = ref_forward(x, Wc, bc, W1, b1, W2, b2)
    assert out.shape == (batch, num_classes)
    assert jnp.allclose(out, ref, atol=1e-5, rtol=1e-5), (out, ref)

    print("KERNEL_OK")
</pallas_src>

<mosaic_0001>
module attributes {stable_mosaic.version = 11 : i64} {
  func.func @kernel(%arg0: memref<112x12xf32, #tpu.memory_space<vmem>>, %arg1: memref<12x128xf32, #tpu.memory_space<vmem>>, %arg2: memref<1x128xf32, #tpu.memory_space<vmem>>, %arg3: memref<896x128xf32, #tpu.memory_space<vmem>>, %arg4: memref<1x128xf32, #tpu.memory_space<vmem>>, %arg5: memref<128x128xf32, #tpu.memory_space<vmem>>, %arg6: memref<1x128xf32, #tpu.memory_space<vmem>>, %arg7: memref<8x128xf32, #tpu.memory_space<vmem>>) attributes {dimension_semantics = [], scalar_prefetch = 0 : i64, scratch_operands = 0 : i64, tpu.core_type = #tpu.core_type<tc>} {
    %c0 = arith.constant 0 : index
    %c0_0 = arith.constant 0 : index
    %0 = vector.load %arg0[%c0, %c0_0] : memref<112x12xf32, #tpu.memory_space<vmem>>, vector<112x12xf32>
    %c0_1 = arith.constant 0 : index
    %c0_2 = arith.constant 0 : index
    %1 = vector.load %arg1[%c0_1, %c0_2] : memref<12x128xf32, #tpu.memory_space<vmem>>, vector<12x128xf32>
    %cst = arith.constant dense<0.000000e+00> : vector<112x128xf32>
    %2 = tpu.matmul %0, %1, %cst {dimension_numbers = #tpu.dot_dimension_numbers<[1], [0], [0], [1], [0, 0, 1, 1], [], []>} : vector<112x12xf32>, vector<12x128xf32>, vector<112x128xf32> -> vector<112x128xf32>
    %c0_3 = arith.constant 0 : index
    %c0_4 = arith.constant 0 : index
    %3 = vector.load %arg2[%c0_3, %c0_4] : memref<1x128xf32, #tpu.memory_space<vmem>>, vector<1x128xf32>
    %4 = vector.broadcast %3 : vector<1x128xf32> to vector<112x128xf32>
    %5 = arith.addf %2, %4 : vector<112x128xf32>
    %cst_5 = arith.constant 0.000000e+00 : f32
    %6 = vector.broadcast %cst_5 : f32 to vector<112x128xf32>
    %7 = arith.maximumf %5, %6 : vector<112x128xf32>
    %8 = vector.extract_strided_slice %7 {offsets = [0, 0], sizes = [56, 128], strides = [1, 1]} : vector<112x128xf32> to vector<56x128xf32>
    %9 = vector.extract_strided_slice %7 {offsets = [56, 0], sizes = [56, 128], strides = [1, 1]} : vector<112x128xf32> to vector<56x128xf32>
    %10 = arith.maximumf %8, %9 : vector<56x128xf32>
    %11 = vector.shape_cast %10 : vector<56x128xf32> to vector<8x896xf32>
    %c0_6 = arith.constant 0 : index
    %c0_7 = arith.constant 0 : index
    %12 = vector.load %arg3[%c0_6, %c0_7] : memref<896x128xf32, #tpu.memory_space<vmem>>, vector<896x128xf32>
    %cst_8 = arith.constant dense<0.000000e+00> : vector<8x128xf32>
    %13 = tpu.matmul %11, %12, %cst_8 {dimension_numbers = #tpu.dot_dimension_numbers<[1], [0], [0], [1], [0, 0, 1, 1], [], []>} : vector<8x896xf32>, vector<896x128xf32>, vector<8x128xf32> -> vector<8x128xf32>
    %c0_9 = arith.constant 0 : index
    %c0_10 = arith.constant 0 : index
    %14 = vector.load %arg4[%c0_9, %c0_10] : memref<1x128xf32, #tpu.memory_space<vmem>>, vector<1x128xf32>
    %15 = vector.broadcast %14 : vector<1x128xf32> to vector<8x128xf32>
    %16 = arith.addf %13, %15 : vector<8x128xf32>
    %cst_11 = arith.constant 0.000000e+00 : f32
    %17 = vector.broadcast %cst_11 : f32 to vector<8x128xf32>
    %18 = arith.maximumf %16, %17 : vector<8x128xf32>
    %c0_12 = arith.constant 0 : index
    %c0_13 = arith.constant 0 : index
    %19 = vector.load %arg5[%c0_12, %c0_13] : memref<128x128xf32, #tpu.memory_space<vmem>>, vector<128x128xf32>
    %cst_14 = arith.constant dense<0.000000e+00> : vector<8x128xf32>
    %20 = tpu.matmul %18, %19, %cst_14 {dimension_numbers = #tpu.dot_dimension_numbers<[1], [0], [0], [1], [0, 0, 1, 1], [], []>} : vector<8x128xf32>, vector<128x128xf32>, vector<8x128xf32> -> vector<8x128xf32>
    %c0_15 = arith.constant 0 : index
    %c0_16 = arith.constant 0 : index
    %21 = vector.load %arg6[%c0_15, %c0_16] : memref<1x128xf32, #tpu.memory_space<vmem>>, vector<1x128xf32>
    %22 = vector.broadcast %21 : vector<1x128xf32> to vector<8x128xf32>
    %23 = arith.addf %20, %22 : vector<8x128xf32>
    %cst_17 = arith.constant dense<0xFF800000> : vector<8xf32>
    %24 = vector.multi_reduction <maximumf>, %23, %cst_17 [1] : vector<8x128xf32> to vector<8xf32>
    %25 = vector.shape_cast %24 : vector<8xf32> to vector<8x1xf32>
    %26 = vector.broadcast %25 : vector<8x1xf32> to vector<8x128xf32>
    %27 = arith.subf %23, %26 : vector<8x128xf32>
    %28 = math.exp %27 : vector<8x128xf32>
    %cst_18 = arith.constant dense<0.000000e+00> : vector<8xf32>
    %29 = vector.multi_reduction <add>, %28, %cst_18 [1] : vector<8x128xf32> to vector<8xf32>
    %30 = vector.shape_cast %29 : vector<8xf32> to vector<8x1xf32>
    %31 = tpu.reciprocal %30 {approx = true} : vector<8x1xf32> -> vector<8x1xf32>
    %32 = arith.mulf %30, %31 : vector<8x1xf32>
    %cst_19 = arith.constant 2.000000e+00 : f32
    %33 = vector.broadcast %cst_19 : f32 to vector<8x1xf32>
    %34 = arith.subf %33, %32 : vector<8x1xf32>
    %35 = arith.mulf %31, %34 : vector<8x1xf32>
    %36 = vector.broadcast %35 : vector<8x1xf32> to vector<8x128xf32>
    %37 = arith.mulf %28, %36 : vector<8x128xf32>
    %c0_20 = arith.constant 0 : index
    %c0_21 = arith.constant 0 : index
    %38 = vector.load %arg7[%c0_20, %c0_21] : memref<8x128xf32, #tpu.memory_space<vmem>>, vector<8x128xf32>
    tpu.vector_store %arg7[%c0_20, %c0_21], %37 {strides = array<i32>} : memref<8x128xf32, #tpu.memory_space<vmem>>, vector<8x128xf32>,
    return
  }
}

</mosaic_0001>

<llo_original>
// kernel: _lambda_.1
$region0: #{_lambda_.1}
  #allocation0 [shape = 'u32[]', space=smem, size = 0x4, offset = 0x4, fixed_abs, tag = 'smem constant byte address 0x4 - core index']
  #allocation1 [shape = 'u32[144,128]{1,0:T(1,128)}', space=vmem, size = 0x12000, scoped, tag = 'internal scratch']
  %s0 = inlined_call_operand.vmem [shape: f32[112,12], index: 0, kind: input, shape index: {}]
  %s1 = inlined_call_operand.vmem [shape: f32[12,128], index: 1, kind: input, shape index: {}]
  %s2 = inlined_call_operand.vmem [shape: f32[1,128], index: 2, kind: input, shape index: {}]
  %s3 = inlined_call_operand.vmem [shape: f32[896,128], index: 3, kind: input, shape index: {}]
  %s4 = inlined_call_operand.vmem [shape: f32[1,128], index: 4, kind: input, shape index: {}]
  %s5 = inlined_call_operand.vmem [shape: f32[128,128], index: 5, kind: input, shape index: {}]
  %s6 = inlined_call_operand.vmem [shape: f32[1,128], index: 6, kind: input, shape index: {}]
  %s7 = inlined_call_operand.vmem [shape: f32[8,128], index: 7, kind: output, shape index: {}]
  %s8 = sld [smem:[#allocation0]]
  $region38: #{_lambda_.1} parent=0
    _
  %s10 = ssub.s32 1, %s8
  %s11 = scalar_select 0, %s10, %s8
  // Predicated region
  $region2: #{_lambda_.1} parent=0 // pred_check
    _
  $region3: #{_lambda_.1} parent=0 // pred_check_branch
    %13 = sbr.rel (0) target = $region5
  $region4: #{_lambda_.1} parent=0 // pred_region
    _
  $region5: #{_lambda_.1} parent=0 // pred_fallthru
    _
  // Predicated region
  $region6: #{_lambda_.1} parent=0 // pred_check
    _
  $region7: #{_lambda_.1} parent=0 // pred_check_branch
    %15 = sbr.rel (0) target = $region9
  $region8: #{_lambda_.1} parent=0 // pred_region
    _
  $region9: #{_lambda_.1} parent=0 // pred_fallthru
    _
  // Predicated region
  $region10: #{_lambda_.1} parent=0 // pred_check
    _
  $region11: #{_lambda_.1} parent=0 // pred_check_branch
    %17 = sbr.rel (0) target = $region13
  $region12: #{_lambda_.1} parent=0 // pred_region
    _
  $region13: #{_lambda_.1} parent=0 // pred_fallthru
    _
  // Predicated region
  $region14: #{_lambda_.1} parent=0 // pred_check
    _
  $region15: #{_lambda_.1} parent=0 // pred_check_branch
    %19 = sbr.rel (0) target = $region17
  $region16: #{_lambda_.1} parent=0 // pred_region
    _
  $region17: #{_lambda_.1} parent=0 // pred_fallthru
    _
  // Predicated region
  $region18: #{_lambda_.1} parent=0 // pred_check
    _
  $region19: #{_lambda_.1} parent=0 // pred_check_branch
    %21 = sbr.rel (0) target = $region21
  $region20: #{_lambda_.1} parent=0 // pred_region
    _
  $region21: #{_lambda_.1} parent=0 // pred_fallthru
    _
  // Predicated region
  $region22: #{_lambda_.1} parent=0 // pred_check
    _
  $region23: #{_lambda_.1} parent=0 // pred_check_branch
    %23 = sbr.rel (0) target = $region25
  $region24: #{_lambda_.1} parent=0 // pred_region
    _
  $region25: #{_lambda_.1} parent=0 // pred_fallthru
    _
  // Predicated region
  $region26: #{_lambda_.1} parent=0 // pred_check
    _
  $region27: #{_lambda_.1} parent=0 // pred_check_branch
    %25 = sbr.rel (0) target = $region29
  $region28: #{_lambda_.1} parent=0 // pred_region
    _
  $region29: #{_lambda_.1} parent=0 // pred_fallthru
    _
  %v26 = vld [vmem:[%s0] sm:$0xff]
  %v27 = vld [vmem:[%s0 + $0x8] sm:$0xff]
  %v28 = vld [vmem:[%s0 + $0x10] sm:$0xff]
  %v29 = vld [vmem:[%s0 + $0x18] sm:$0xff]
  %v30 = vld [vmem:[%s0 + $0x20] sm:$0xff]
  %v31 = vld [vmem:[%s0 + $0x28] sm:$0xff]
  %v32 = vld [vmem:[%s0 + $0x30] sm:$0xff]
  %v33 = vld [vmem:[%s0 + $0x38] sm:$0xff]
  %v34 = vld [vmem:[%s0 + $0x40] sm:$0xff]
  %v35 = vld [vmem:[%s0 + $0x48] sm:$0xff]
  %v36 = vld [vmem:[%s0 + $0x50] sm:$0xff]
  %v37 = vld [vmem:[%s0 + $0x58] sm:$0xff]
  %v38 = vld [vmem:[%s0 + $0x60] sm:$0xff]
  %v39 = vld [vmem:[%s0 + $0x68] sm:$0xff]
  %v40 = vld [vmem:[%s1] sm:$0xff]
  %v41 = vld [vmem:[%s1 + $0x8] sm:$0xf]
  %v42 = vld [vmem:[%s2] sm:$0x1]
  %v44 = vlaneseq
  %v45 = vshrl.u32 %v44, 7
  %v46 = vsub.s32 0, %v45
  %v47 = vrot.slane %v42, %v46
  %vm49 = vcmask 97280
  %v51 = vsel %vm49, %v26, 0
  %v54 = vsel %vm49, %v27, 0
  %v57 = vsel %vm49, %v28, 0
  %v60 = vsel %vm49, %v29, 0
  %v63 = vsel %vm49, %v30, 0
  %v66 = vsel %vm49, %v31, 0
  %v69 = vsel %vm49, %v32, 0
  %v72 = vsel %vm49, %v33, 0
  %v75 = vsel %vm49, %v34, 0
  %v78 = vsel %vm49, %v35, 0
  %v81 = vsel %vm49, %v36, 0
  %v84 = vsel %vm49, %v37, 0
  %v87 = vsel %vm49, %v38, 0
  %v90 = vsel %vm49, %v39, 0
  %vm92 = vcmask 1043456
  %v94 = vsel %vm92, %v41, 0
  %96 = vmatprep.subr.mxu0 0.0
  %97 = vmatpush1.msra.mxu0 0.0
  %98 = vmatprep.subr.mxu0 0.0
  %99 = vmatpush1.msra.mxu0 0.0
  %100 = vmatprep.subr.mxu0 0.0
  %101 = vmatpush1.msra.mxu0 0.0
  %102 = vmatprep.subr.mxu0 0.0
  %103 = vmatpush1.msra.mxu0 0.0
  %104 = vmatprep.subr.mxu0 0.0
  %105 = vmatpush1.msra.mxu0 0.0
  %106 = vmatprep.subr.mxu0 0.0
  %107 = vmatpush1.msra.mxu0 0.0
  %108 = vmatprep.subr.mxu0 0.0
  %109 = vmatpush1.msra.mxu0 0.0
  %110 = vmatprep.subr.mxu0 0.0
  %111 = vmatpush1.msra.mxu0 0.0
  %112 = vmatprep.subr.mxu0 0.0
  %113 = vmatpush1.msra.mxu0 0.0
  %114 = vmatprep.subr.mxu0 0.0
  %115 = vmatpush1.msra.mxu0 0.0
  %116 = vmatprep.subr.mxu0 0.0
  %117 = vmatpush1.msra.mxu0 0.0
  %118 = vmatprep.subr.mxu0 0.0
  %119 = vmatpush1.msra.mxu0 0.0
  %120 = vmatprep.subr.mxu0 0.0
  %121 = vmatpush1.msra.mxu0 0.0
  %122 = vmatprep.subr.mxu0 0.0
  %123 = vmatpush1.msra.mxu0 0.0
  %124 = vmatprep.subr.mxu0 0.0
  %125 = vmatpush1.msra.mxu0 %v94
  %126 = vmatprep.subr.mxu0 0.0
  %127 = vmatpush1.msra.mxu0 %v40
  %128 = vmatprep.subr.mxu0 0.0
  %129 = vmatpush2.msra.mxu0 0.0
  %130 = vmatprep.subr.mxu0 0.0
  %131 = vmatpush2.msra.mxu0 0.0
  %132 = vmatprep.subr.mxu0 0.0
  %133 = vmatpush2.msra.mxu0 0.0
  %134 = vmatprep.subr.mxu0 0.0
  %135 = vmatpush2.msra.mxu0 0.0
  %136 = vmatprep.subr.mxu0 0.0
  %137 = vmatpush2.msra.mxu0 0.0
  %138 = vmatprep.subr.mxu0 0.0
  %139 = vmatpush2.msra.mxu0 0.0
  %140 = vmatprep.subr.mxu0 0.0
  %141 = vmatpush2.msra.mxu0 0.0
  %142 = vmatprep.subr.mxu0 0.0
  %143 = vmatpush2.msra.mxu0 0.0
  %144 = vmatprep.subr.mxu0 0.0
  %145 = vmatpush2.msra.mxu0 0.0
  %146 = vmatprep.subr.mxu0 0.0
  %147 = vmatpush2.msra.mxu0 0.0
  %148 = vmatprep.subr.mxu0 0.0
  %149 = vmatpush2.msra.mxu0 0.0
  %150 = vmatprep.subr.mxu0 0.0
  %151 = vmatpush2.msra.mxu0 0.0
  %152 = vmatprep.subr.mxu0 0.0
  %153 = vmatpush2.msra.mxu0 0.0
  %154 = vmatprep.subr.mxu0 0.0
  %155 = vmatpush2.msra.mxu0 0.0
  %156 = vmatprep.subr.mxu0 0.0
  %157 = vmatpush2.msra.mxu0 0.0
  %158 = vmatprep.subr.mxu0 0.0
  %159 = vmatpush2.msra.mxu0 0.0
  %160 = vmatprep.mubr.f32.mxu0 0.0
  %161 = vmatmul.mubr.f32.gmra.mxu0 %v51
  %v162 = vpop.f32.mrf.mxu0
  %v163 = vadd.f32 %v47, %v162
  %v164 = vpop.f32.mrf.mxu0
  %165 = vmatprep.mubr.f32.mxu0 0.0
  %166 = vmatmul.mubr.f32.gmra.mxu0 %v54
  %v167 = vpop.f32.mrf.mxu0
  %v168 = vadd.f32 %v47, %v167
  %v169 = vpop.f32.mrf.mxu0
  %170 = vmatprep.mubr.f32.mxu0 0.0
  %171 = vmatmul.mubr.f32.gmra.mxu0 %v57
  %v172 = vpop.f32.mrf.mxu0
  %v173 = vadd.f32 %v47, %v172
  %v174 = vpop.f32.mrf.mxu0
  %175 = vmatprep.mubr.f32.mxu0 0.0
  %176 = vmatmul.mubr.f32.gmra.mxu0 %v60
  %v177 = vpop.f32.mrf.mxu0
  %v178 = vadd.f32 %v47, %v177
  %v179 = vpop.f32.mrf.mxu0
  %180 = vmatprep.mubr.f32.mxu0 0.0
  %181 = vmatmul.mubr.f32.gmra.mxu0 %v63
  %v182 = vpop.f32.mrf.mxu0
  %v183 = vadd.f32 %v47, %v182
  %v184 = vpop.f32.mrf.mxu0
  %185 = vmatprep.mubr.f32.mxu0 0.0
  %186 = vmatmul.mubr.f32.gmra.mxu0 %v66
  %v187 = vpop.f32.mrf.mxu0
  %v188 = vadd.f32 %v47, %v187
  %v189 = vpop.f32.mrf.mxu0
  %190 = vmatprep.mubr.f32.mxu0 0.0
  %191 = vmatmul.mubr.f32.gmra.mxu0 %v69
  %v192 = vpop.f32.mrf.mxu0
  %v193 = vadd.f32 %v47, %v192
  %v194 = vpop.f32.mrf.mxu0
  %195 = vmatprep.mubr.f32.mxu0 0.0
  %196 = vmatmul.mubr.f32.gmra.mxu0 %v72
  %v197 = vpop.f32.mrf.mxu0
  %v198 = vadd.f32 %v47, %v197
  %v199 = vpop.f32.mrf.mxu0
  %200 = vmatprep.mubr.f32.mxu0 0.0
  %201 = vmatmul.mubr.f32.gmra.mxu0 %v75
  %v202 = vpop.f32.mrf.mxu0
  %v203 = vadd.f32 %v47, %v202
  %v204 = vpop.f32.mrf.mxu0
  %205 = vmatprep.mubr.f32.mxu0 0.0
  %206 = vmatmul.mubr.f32.gmra.mxu0 %v78
  %v207 = vpop.f32.mrf.mxu0
  %v208 = vadd.f32 %v47, %v207
  %v209 = vpop.f32.mrf.mxu0
  %210 = vmatprep.mubr.f32.mxu0 0.0
  %211 = vmatmul.mubr.f32.gmra.mxu0 %v81
  %v212 = vpop.f32.mrf.mxu0
  %v213 = vadd.f32 %v47, %v212
  %v214 = vpop.f32.mrf.mxu0
  %215 = vmatprep.mubr.f32.mxu0 0.0
  %216 = vmatmul.mubr.f32.gmra.mxu0 %v84
  %v217 = vpop.f32.mrf.mxu0
  %v218 = vadd.f32 %v47, %v217
  %v219 = vpop.f32.mrf.mxu0
  %220 = vmatprep.mubr.f32.mxu0 0.0
  %221 = vmatmul.mubr.f32.gmra.mxu0 %v87
  %v222 = vpop.f32.mrf.mxu0
  %v223 = vadd.f32 %v47, %v222
  %v224 = vpop.f32.mrf.mxu0
  %225 = vmatprep.mubr.f32.mxu0 0.0
  %226 = vmatmul.mubr.f32.gmra.mxu0 %v90
  %v227 = vpop.f32.mrf.mxu0
  %v228 = vadd.f32 %v47, %v227
  %v229 = vpop.f32.mrf.mxu0
  %230 = vdwg.mxu0
  %v231 = vmax.f32 %v163, 0.0
  %v232 = vmax.f32 %v168, 0.0
  %v233 = vmax.f32 %v173, 0.0
  %v234 = vmax.f32 %v178, 0.0
  %v235 = vmax.f32 %v183, 0.0
  %v236 = vmax.f32 %v188, 0.0
  %v237 = vmax.f32 %v193, 0.0
  %v238 = vmax.f32 %v198, 0.0
  %v239 = vmax.f32 %v203, 0.0
  %v240 = vmax.f32 %v208, 0.0
  %v241 = vmax.f32 %v213, 0.0
  %v242 = vmax.f32 %v218, 0.0
  %v243 = vmax.f32 %v223, 0.0
  %v244 = vmax.f32 %v228, 0.0
  %v245 = vmax.f32 %v231, %v238
  %v246 = vmax.f32 %v232, %v239
  %v247 = vmax.f32 %v233, %v240
  %v248 = vmax.f32 %v234, %v241
  %v249 = vmax.f32 %v235, %v242
  %v250 = vmax.f32 %v236, %v243
  %v251 = vmax.f32 %v237, %v244
  %vm252 = vcmask 1040384
  %v253 = vsel %vm252, %v245, 0.0
  %v254 = vrot.slane %v245, 6
  %vm255 = vcmask 1041409
  %v256 = vsel %vm255, %v254, %v253
  %v257 = vrot.slane %v246, 4
  %vm258 = vcmask 1042434
  %v259 = vsel %vm258, %v257, %v256
  %v260 = vrot.slane %v247, 2
  %vm261 = vcmask 1043459
  %v262 = vsel %vm261, %v260, %v259
  %vm263 = vcmask 1044484
  %v264 = vsel %vm263, %v248, %v262
  %v265 = vrot.slane %v249, 6
  %vm266 = vcmask 1045509
  %v267 = vsel %vm266, %v265, %v264
  %v268 = vrot.slane %v250, 4
  %vm269 = vcmask 1046534
  %v270 = vsel %vm269, %v268, %v267
  %v271 = vrot.slane %v251, 2
  %vm272 = vcmask 1047559
  %v273 = vsel %vm272, %v271, %v270
  %v274 = vrot.slane %v245, 1
  %v275 = vsel %vm252, %v274, 0.0
  %v276 = vrot.slane %v246, 7
  %v277 = vsel %vm255, %v276, %v275
  %v278 = vrot.slane %v246, 5
  %v279 = vsel %vm258, %v278, %v277
  %v280 = vrot.slane %v247, 3
  %v281 = vsel %vm261, %v280, %v279
  %v282 = vrot.slane %v248, 1
  %v283 = vsel %vm263, %v282, %v281
  %v284 = vrot.slane %v249, 7
  %v285 = vsel %vm266, %v284, %v283
  %v286 = vrot.slane %v250, 5
  %v287 = vsel %vm269, %v286, %v285
  %v288 = vrot.slane %v251, 3
  %v289 = vsel %vm272, %v288, %v287
  %v290 = vrot.slane %v245, 2
  %v291 = vsel %vm252, %v290, 0.0
  %v292 = vsel %vm255, %v246, %v291
  %v293 = vrot.slane %v247, 6
  %v294 = vsel %vm258, %v293, %v292
  %v295 = vrot.slane %v247, 4
  %v296 = vsel %vm261, %v295, %v294
  %v297 = vrot.slane %v248, 2
  %v298 = vsel %vm263, %v297, %v296
  %v299 = vsel %vm266, %v249, %v298
  %v300 = vrot.slane %v250, 6
  %v301 = vsel %vm269, %v300, %v299
  %v302 = vrot.slane %v251, 4
  %v303 = vsel %vm272, %v302, %v301
  %v304 = vrot.slane %v245, 3
  %v305 = vsel %vm252, %v304, 0.0
  %v306 = vrot.slane %v246, 1
  %v307 = vsel %vm255, %v306, %v305
  %v308 = vrot.slane %v247, 7
  %v309 = vsel %vm258, %v308, %v307
  %v310 = vrot.slane %v248, 5
  %v311 = vsel %vm261, %v310, %v309
  %v312 = vrot.slane %v248, 3
  %v313 = vsel %vm263, %v312, %v311
  %v314 = vrot.slane %v249, 1
  %v315 = vsel %vm266, %v314, %v313
  %v316 = vrot.slane %v250, 7
  %v317 = vsel %vm269, %v316, %v315
  %v318 = vrot.slane %v251, 5
  %v319 = vsel %vm272, %v318, %v317
  %v320 = vrot.slane %v245, 4
  %v321 = vsel %vm252, %v320, 0.0
  %v322 = vrot.slane %v246, 2
  %v323 = vsel %vm255, %v322, %v321
  %v324 = vsel %vm258, %v247, %v323
  %v325 = vrot.slane %v248, 6
  %v326 = vsel %vm261, %v325, %v324
  %v327 = vrot.slane %v249, 4
  %v328 = vsel %vm263, %v327, %v326
  %v329 = vrot.slane %v249, 2
  %v330 = vsel %vm266, %v329, %v328
  %v331 = vsel %vm269, %v250, %v330
  %v332 = vrot.slane %v251, 6
  %v333 = vsel %vm272, %v332, %v331
  %v334 = vrot.slane %v245, 5
  %v335 = vsel %vm252, %v334, 0.0
  %v336 = vrot.slane %v246, 3
  %v337 = vsel %vm255, %v336, %v335
  %v338 = vrot.slane %v247, 1
  %v339 = vsel %vm258, %v338, %v337
  %v340 = vrot.slane %v248, 7
  %v341 = vsel %vm261, %v340, %v339
  %v342 = vrot.slane %v249, 5
  %v343 = vsel %vm263, %v342, %v341
  %v344 = vrot.slane %v250, 3
  %v345 = vsel %vm266, %v344, %v343
  %v346 = vrot.slane %v250, 1
  %v347 = vsel %vm269, %v346, %v345
  %v348 = vrot.slane %v251, 7
  %v349 = vsel %vm272, %v348, %v347
  %v350 = vsel %vm252, %v254, 0.0
  %v351 = vsel %vm255, %v257, %v350
  %v352 = vsel %vm258, %v260, %v351
  %v353 = vsel %vm261, %v248, %v352
  %v354 = vsel %vm263, %v265, %v353
  %v355 = vsel %vm266, %v268, %v354
  %v356 = vsel %vm269, %v271, %v355
  %v357 = vsel %vm272, %v251, %v356
  %v358 = vld [vmem:[%s3] sm:$0xff]
  %v359 = vld [vmem:[%s3 + $0x8] sm:$0xff]
  %v360 = vld [vmem:[%s3 + $0x10] sm:$0xff]
  %v361 = vld [vmem:[%s3 + $0x18] sm:$0xff]
  %v362 = vld [vmem:[%s3 + $0x20] sm:$0xff]
  %v363 = vld [vmem:[%s3 + $0x28] sm:$0xff]
  %v364 = vld [vmem:[%s3 + $0x30] sm:$0xff]
  %v365 = vld [vmem:[%s3 + $0x38] sm:$0xff]
  %v366 = vld [vmem:[%s3 + $0x40] sm:$0xff]
  %v367 = vld [vmem:[%s3 + $0x48] sm:$0xff]
  %v368 = vld [vmem:[%s3 + $0x50] sm:$0xff]
  %v369 = vld [vmem:[%s3 + $0x58] sm:$0xff]
  %v370 = vld [vmem:[%s3 + $0x60] sm:$0xff]
  %v371 = vld [vmem:[%s3 + $0x68] sm:$0xff]
  %v372 = vld [vmem:[%s3 + $0x70] sm:$0xff]
  %v373 = vld [vmem:[%s3 + $0x78] sm:$0xff]
  %v374 = vld [vmem:[%s3 + $0x80] sm:$0xff]
  %v375 = vld [vmem:[%s3 + $0x88] sm:$0xff]
  %v376 = vld [vmem:[%s3 + $0x90] sm:$0xff]
  %v377 = vld [vmem:[%s3 + $0x98] sm:$0xff]
  %v378 = vld [vmem:[%s3 + $0xa0] sm:$0xff]
  %v379 = vld [vmem:[%s3 + $0xa8] sm:$0xff]
  %v380 = vld [vmem:[%s3 + $0xb0] sm:$0xff]
  %v381 = vld [vmem:[%s3 + $0xb8] sm:$0xff]
  %v382 = vld [vmem:[%s3 + $0xc0] sm:$0xff]
  %v383 = vld [vmem:[%s3 + $0xc8] sm:$0xff]
  %v384 = vld [vmem:[%s3 + $0xd0] sm:$0xff]
  %v385 = vld [vmem:[%s3 + $0xd8] sm:$0xff]
  %v386 = vld [vmem:[%s3 + $0xe0] sm:$0xff]
  %v387 = vld [vmem:[%s3 + $0xe8] sm:$0xff]
  %v388 = vld [vmem:[%s3 + $0xf0] sm:$0xff]
  %v389 = vld [vmem:[%s3 + $0xf8] sm:$0xff]
  %v390 = vld [vmem:[%s3 + $0x100] sm:$0xff]
  %v391 = vld [vmem:[%s3 + $0x108] sm:$0xff]
  %v392 = vld [vmem:[%s3 + $0x110] sm:$0xff]
  %v393 = vld [vmem:[%s3 + $0x118] sm:$0xff]
  %v394 = vld [vmem:[%s3 + $0x120] sm:$0xff]
  %v395 = vld [vmem:[%s3 + $0x128] sm:$0xff]
  %v396 = vld [vmem:[%s3 + $0x130] sm:$0xff]
  %v397 = vld [vmem:[%s3 + $0x138] sm:$0xff]
  %v398 = vld [vmem:[%s3 + $0x140] sm:$0xff]
  %v399 = vld [vmem:[%s3 + $0x148] sm:$0xff]
  %v400 = vld [vmem:[%s3 + $0x150] sm:$0xff]
  %v401 = vld [vmem:[%s3 + $0x158] sm:$0xff]
  %v402 = vld [vmem:[%s3 + $0x160] sm:$0xff]
  %v403 = vld [vmem:[%s3 + $0x168] sm:$0xff]
  %v404 = vld [vmem:[%s3 + $0x170] sm:$0xff]
  %v405 = vld [vmem:[%s3 + $0x178] sm:$0xff]
  %v406 = vld [vmem:[%s3 + $0x180] sm:$0xff]
  %v407 = vld [vmem:[%s3 + $0x188] sm:$0xff]
  %v408 = vld [vmem:[%s3 + $0x190] sm:$0xff]
  %v409 = vld [vmem:[%s3 + $0x198] sm:$0xff]
  %v410 = vld [vmem:[%s3 + $0x1a0] sm:$0xff]
  %v411 = vld [vmem:[%s3 + $0x1a8] sm:$0xff]
  %v412 = vld [vmem:[%s3 + $0x1b0] sm:$0xff]
  %v413 = vld [vmem:[%s3 + $0x1b8] sm:$0xff]
  %v414 = vld [vmem:[%s3 + $0x1c0] sm:$0xff]
  %v415 = vld [vmem:[%s3 + $0x1c8] sm:$0xff]
  %v416 = vld [vmem:[%s3 + $0x1d0] sm:$0xff]
  %v417 = vld [vmem:[%s3 + $0x1d8] sm:$0xff]
  %v418 = vld [vmem:[%s3 + $0x1e0] sm:$0xff]
  %v419 = vld [vmem:[%s3 + $0x1e8] sm:$0xff]
  %v420 = vld [vmem:[%s3 + $0x1f0] sm:$0xff]
  %v421 = vld [vmem:[%s3 + $0x1f8] sm:$0xff]
  %v422 = vld [vmem:[%s3 + $0x200] sm:$0xff]
  %v423 = vld [vmem:[%s3 + $0x208] sm:$0xff]
  %v424 = vld [vmem:[%s3 + $0x210] sm:$0xff]
  %v425 = vld [vmem:[%s3 + $0x218] sm:$0xff]
  %v426 = vld [vmem:[%s3 + $0x220] sm:$0xff]
  %v427 = vld [vmem:[%s3 + $0x228] sm:$0xff]
  %v428 = vld [vmem:[%s3 + $0x230] sm:$0xff]
  %v429 = vld [vmem:[%s3 + $0x238] sm:$0xff]
  %v430 = vld [vmem:[%s3 + $0x240] sm:$0xff]
  %v431 = vld [vmem:[%s3 + $0x248] sm:$0xff]
  %v432 = vld [vmem:[%s3 + $0x250] sm:$0xff]
  %v433 = vld [vmem:[%s3 + $0x258] sm:$0xff]
  %v434 = vld [vmem:[%s3 + $0x260] sm:$0xff]
  %v435 = vld [vmem:[%s3 + $0x268] sm:$0xff]
  %v436 = vld [vmem:[%s3 + $0x270] sm:$0xff]
  %v437 = vld [vmem:[%s3 + $0x278] sm:$0xff]
  %v438 = vld [vmem:[%s3 + $0x280] sm:$0xff]
  %v439 = vld [vmem:[%s3 + $0x288] sm:$0xff]
  %v440 = vld [vmem:[%s3 + $0x290] sm:$0xff]
  %v441 = vld [vmem:[%s3 + $0x298] sm:$0xff]
  %v442 = vld [vmem:[%s3 + $0x2a0] sm:$0xff]
  %v443 = vld [vmem:[%s3 + $0x2a8] sm:$0xff]
  %v444 = vld [vmem:[%s3 + $0x2b0] sm:$0xff]
  %v445 = vld [vmem:[%s3 + $0x2b8] sm:$0xff]
  %v446 = vld [vmem:[%s3 + $0x2c0] sm:$0xff]
  %v447 = vld [vmem:[%s3 + $0x2c8] sm:$0xff]
  %v448 = vld [vmem:[%s3 + $0x2d0] sm:$0xff]
  %v449 = vld [vmem:[%s3 + $0x2d8] sm:$0xff]
  %v450 = vld [vmem:[%s3 + $0x2e0] sm:$0xff]
  %v451 = vld [vmem:[%s3 + $0x2e8] sm:$0xff]
  %v452 = vld [vmem:[%s3 + $0x2f0] sm:$0xff]
  %v453 = vld [vmem:[%s3 + $0x2f8] sm:$0xff]
  %v454 = vld [vmem:[%s3 + $0x300] sm:$0xff]
  %v455 = vld [vmem:[%s3 + $0x308] sm:$0xff]
  %v456 = vld [vmem:[%s3 + $0x310] sm:$0xff]
  %v457 = vld [vmem:[%s3 + $0x318] sm:$0xff]
  %v458 = vld [vmem:[%s3 + $0x320] sm:$0xff]
  %v459 = vld [vmem:[%s3 + $0x328] sm:$0xff]
  %v460 = vld [vmem:[%s3 + $0x330] sm:$0xff]
  %v461 = vld [vmem:[%s3 + $0x338] sm:$0xff]
  %v462 = vld [vmem:[%s3 + $0x340] sm:$0xff]
  %v463 = vld [vmem:[%s3 + $0x348] sm:$0xff]
  %v464 = vld [vmem:[%s3 + $0x350] sm:$0xff]
  %v465 = vld [vmem:[%s3 + $0x358] sm:$0xff]
  %v466 = vld [vmem:[%s3 + $0x360] sm:$0xff]
  %v467 = vld [vmem:[%s3 + $0x368] sm:$0xff]
  %v468 = vld [vmem:[%s3 + $0x370] sm:$0xff]
  %v469 = vld [vmem:[%s3 + $0x378] sm:$0xff]
  %v470 = vld [vmem:[%s4] sm:$0x1]
  %v472 = vlaneseq
  %v473 = vshrl.u32 %v472, 7
  %v474 = vsub.s32 0, %v473
  %v475 = vrot.slane %v470, %v474
  %477 = vmatprep.subr.mxu0 0.0
  %478 = vmatpush1.msra.mxu0 %v373
  %479 = vmatprep.subr.mxu0 0.0
  %480 = vmatpush1.msra.mxu0 %v372
  %481 = vmatprep.subr.mxu0 0.0
  %482 = vmatpush1.msra.mxu0 %v371
  %483 = vmatprep.subr.mxu0 0.0
  %484 = vmatpush1.msra.mxu0 %v370
  %485 = vmatprep.subr.mxu0 0.0
  %486 = vmatpush1.msra.mxu0 %v369
  %487 = vmatprep.subr.mxu0 0.0
  %488 = vmatpush1.msra.mxu0 %v368
  %489 = vmatprep.subr.mxu0 0.0
  %490 = vmatpush1.msra.mxu0 %v367
  %491 = vmatprep.subr.mxu0 0.0
  %492 = vmatpush1.msra.mxu0 %v366
  %493 = vmatprep.subr.mxu0 0.0
  %494 = vmatpush1.msra.mxu0 %v365
  %495 = vmatprep.subr.mxu0 0.0
  %496 = vmatpush1.msra.mxu0 %v364
  %497 = vmatprep.subr.mxu0 0.0
  %498 = vmatpush1.msra.mxu0 %v363
  %499 = vmatprep.subr.mxu0 0.0
  %500 = vmatpush1.msra.mxu0 %v362
  %501 = vmatprep.subr.mxu0 0.0
  %502 = vmatpush1.msra.mxu0 %v361
  %503 = vmatprep.subr.mxu0 0.0
  %504 = vmatpush1.msra.mxu0 %v360
  %505 = vmatprep.subr.mxu0 0.0
  %506 = vmatpush1.msra.mxu0 %v359
  %507 = vmatprep.subr.mxu0 0.0
  %508 = vmatpush1.msra.mxu0 %v358
  %509 = vmatprep.subr.mxu0 0.0
  %510 = vmatpush2.msra.mxu0 %v389
  %511 = vmatprep.subr.mxu0 0.0
  %512 = vmatpush2.msra.mxu0 %v388
  %513 = vmatprep.subr.mxu0 0.0
  %514 = vmatpush2.msra.mxu0 %v387
  %515 = vmatprep.subr.mxu0 0.0
  %516 = vmatpush2.msra.mxu0 %v386
  %517 = vmatprep.subr.mxu0 0.0
  %518 = vmatpush2.msra.mxu0 %v385
  %519 = vmatprep.subr.mxu0 0.0
  %520 = vmatpush2.msra.mxu0 %v384
  %521 = vmatprep.subr.mxu0 0.0
  %522 = vmatpush2.msra.mxu0 %v383
  %523 = vmatprep.subr.mxu0 0.0
  %524 = vmatpush2.msra.mxu0 %v382
  %525 = vmatprep.subr.mxu0 0.0
  %526 = vmatpush2.msra.mxu0 %v381
  %527 = vmatprep.subr.mxu0 0.0
  %528 = vmatpush2.msra.mxu0 %v380
  %529 = vmatprep.subr.mxu0 0.0
  %530 = vmatpush2.msra.mxu0 %v379
  %531 = vmatprep.subr.mxu0 0.0
  %532 = vmatpush2.msra.mxu0 %v378
  %533 = vmatprep.subr.mxu0 0.0
  %534 = vmatpush2.msra.mxu0 %v377
  %535 = vmatprep.subr.mxu0 0.0
  %536 = vmatpush2.msra.mxu0 %v376
  %537 = vmatprep.subr.mxu0 0.0
  %538 = vmatpush2.msra.mxu0 %v375
  %539 = vmatprep.subr.mxu0 0.0
  %540 = vmatpush2.msra.mxu0 %v374
  %541 = vmatprep.mubr.f32.mxu0 %v289
  %542 = vmatmul.mubr.f32.gmra.mxu0 %v273
  %v543 = vpop.f32.mrf.mxu0
  %v544 = vadd.f32 %v475, %v543
  %v545 = vpop.f32.mrf.mxu0
  %546 = vdwg.mxu0
  %547 = vmatprep.subr.mxu0 0.0
  %548 = vmatpush1.msra.mxu0 %v405
  %549 = vmatprep.subr.mxu0 0.0
  %550 = vmatpush1.msra.mxu0 %v404
  %551 = vmatprep.subr.mxu0 0.0
  %552 = vmatpush1.msra.mxu0 %v403
  %553 = vmatprep.subr.mxu0 0.0
  %554 = vmatpush1.msra.mxu0 %v402
  %555 = vmatprep.subr.mxu0 0.0
  %556 = vmatpush1.msra.mxu0 %v401
  %557 = vmatprep.subr.mxu0 0.0
  %558 = vmatpush1.msra.mxu0 %v400
  %559 = vmatprep.subr.mxu0 0.0
  %560 = vmatpush1.msra.mxu0 %v399
  %561 = vmatprep.subr.mxu0 0.0
  %562 = vmatpush1.msra.mxu0 %v398
  %563 = vmatprep.subr.mxu0 0.0
  %564 = vmatpush1.msra.mxu0 %v397
  %565 = vmatprep.subr.mxu0 0.0
  %566 = vmatpush1.msra.mxu0 %v396
  %567 = vmatprep.subr.mxu0 0.0
  %568 = vmatpush1.msra.mxu0 %v395
  %569 = vmatprep.subr.mxu0 0.0
  %570 = vmatpush1.msra.mxu0 %v394
  %571 = vmatprep.subr.mxu0 0.0
  %572 = vmatpush1.msra.mxu0 %v393
  %573 = vmatprep.subr.mxu0 0.0
  %574 = vmatpush1.msra.mxu0 %v392
  %575 = vmatprep.subr.mxu0 0.0
  %576 = vmatpush1.msra.mxu0 %v391
  %577 = vmatprep.subr.mxu0 0.0
  %578 = vmatpush1.msra.mxu0 %v390
  %579 = vmatprep.subr.mxu0 0.0
  %580 = vmatpush2.msra.mxu0 %v421
  %581 = vmatprep.subr.mxu0 0.0
  %582 = vmatpush2.msra.mxu0 %v420
  %583 = vmatprep.subr.mxu0 0.0
  %584 = vmatpush2.msra.mxu0 %v419
  %585 = vmatprep.subr.mxu0 0.0
  %586 = vmatpush2.msra.mxu0 %v418
  %587 = vmatprep.subr.mxu0 0.0
  %588 = vmatpush2.msra.mxu0 %v417
  %589 = vmatprep.subr.mxu0 0.0
  %590 = vmatpush2.msra.mxu0 %v416
  %591 = vmatprep.subr.mxu0 0.0
  %592 = vmatpush2.msra.mxu0 %v415
  %593 = vmatprep.subr.mxu0 0.0
  %594 = vmatpush2.msra.mxu0 %v414
  %595 = vmatprep.subr.mxu0 0.0
  %596 = vmatpush2.msra.mxu0 %v413
  %597 = vmatprep.subr.mxu0 0.0
  %598 = vmatpush2.msra.mxu0 %v412
  %599 = vmatprep.subr.mxu0 0.0
  %600 = vmatpush2.msra.mxu0 %v411
  %601 = vmatprep.subr.mxu0 0.0
  %602 = vmatpush2.msra.mxu0 %v410
  %603 = vmatprep.subr.mxu0 0.0
  %604 = vmatpush2.msra.mxu0 %v409
  %605 = vmatprep.subr.mxu0 0.0
  %606 = vmatpush2.msra.mxu0 %v408
  %607 = vmatprep.subr.mxu0 0.0
  %608 = vmatpush2.msra.mxu0 %v407
  %609 = vmatprep.subr.mxu0 0.0
  %610 = vmatpush2.msra.mxu0 %v406
  %611 = vmatprep.mubr.f32.mxu0 %v319
  %612 = vmatmul.mubr.f32.gmra.mxu0 %v303
  %v613 = vpop.f32.mrf.mxu0
  %v614 = vadd.f32 %v544, %v613
  %v615 = vpop.f32.mrf.mxu0
  %616 = vdwg.mxu0
  %617 = vmatprep.subr.mxu0 0.0
  %618 = vmatpush1.msra.mxu0 %v437
  %619 = vmatprep.subr.mxu0 0.0
  %620 = vmatpush1.msra.mxu0 %v436
  %621 = vmatprep.subr.mxu0 0.0
  %622 = vmatpush1.msra.mxu0 %v435
  %623 = vmatprep.subr.mxu0 0.0
  %624 = vmatpush1.msra.mxu0 %v434
  %625 = vmatprep.subr.mxu0 0.0
  %626 = vmatpush1.msra.mxu0 %v433
  %627 = vmatprep.subr.mxu0 0.0
  %628 = vmatpush1.msra.mxu0 %v432
  %629 = vmatprep.subr.mxu0 0.0
  %630 = vmatpush1.msra.mxu0 %v431
  %631 = vmatprep.subr.mxu0 0.0
  %632 = vmatpush1.msra.mxu0 %v430
  %633 = vmatprep.subr.mxu0 0.0
  %634 = vmatpush1.msra.mxu0 %v429
  %635 = vmatprep.subr.mxu0 0.0
  %636 = vmatpush1.msra.mxu0 %v428
  %637 = vmatprep.subr.mxu0 0.0
  %638 = vmatpush1.msra.mxu0 %v427
  %639 = vmatprep.subr.mxu0 0.0
  %640 = vmatpush1.msra.mxu0 %v426
  %641 = vmatprep.subr.mxu0 0.0
  %642 = vmatpush1.msra.mxu0 %v425
  %643 = vmatprep.subr.mxu0 0.0
  %644 = vmatpush1.msra.mxu0 %v424
  %645 = vmatprep.subr.mxu0 0.0
  %646 = vmatpush1.msra.mxu0 %v423
  %647 = vmatprep.subr.mxu0 0.0
  %648 = vmatpush1.msra.mxu0 %v422
  %649 = vmatprep.subr.mxu0 0.0
  %650 = vmatpush2.msra.mxu0 %v453
  %651 = vmatprep.subr.mxu0 0.0
  %652 = vmatpush2.msra.mxu0 %v452
  %653 = vmatprep.subr.mxu0 0.0
  %654 = vmatpush2.msra.mxu0 %v451
  %655 = vmatprep.subr.mxu0 0.0
  %656 = vmatpush2.msra.mxu0 %v450
  %657 = vmatprep.subr.mxu0 0.0
  %658 = vmatpush2.msra.mxu0 %v449
  %659 = vmatprep.subr.mxu0 0.0
  %660 = vmatpush2.msra.mxu0 %v448
  %661 = vmatprep.subr.mxu0 0.0
  %662 = vmatpush2.msra.mxu0 %v447
  %663 = vmatprep.subr.mxu0 0.0
  %664 = vmatpush2.msra.mxu0 %v446
  %665 = vmatprep.subr.mxu0 0.0
  %666 = vmatpush2.msra.mxu0 %v445
  %667 = vmatprep.subr.mxu0 0.0
  %668 = vmatpush2.msra.mxu0 %v444
  %669 = vmatprep.subr.mxu0 0.0
  %670 = vmatpush2.msra.mxu0 %v443
  %671 = vmatprep.subr.mxu0 0.0
  %672 = vmatpush2.msra.mxu0 %v442
  %673 = vmatprep.subr.mxu0 0.0
  %674 = vmatpush2.msra.mxu0 %v441
  %675 = vmatprep.subr.mxu0 0.0
  %676 = vmatpush2.msra.mxu0 %v440
  %677 = vmatprep.subr.mxu0 0.0
  %678 = vmatpush2.msra.mxu0 %v439
  %679 = vmatprep.subr.mxu0 0.0
  %680 = vmatpush2.msra.mxu0 %v438
  %681 = vmatprep.mubr.f32.mxu0 %v349
  %682 = vmatmul.mubr.f32.gmra.mxu0 %v333
  %v683 = vpop.f32.mrf.mxu0
  %v684 = vadd.f32 %v614, %v683
  %v685 = vpop.f32.mrf.mxu0
  %686 = vdwg.mxu0
  %687 = vmatprep.subr.mxu0 0.0
  %688 = vmatpush1.msra.mxu0 %v469
  %689 = vmatprep.subr.mxu0 0.0
  %690 = vmatpush1.msra.mxu0 %v468
  %691 = vmatprep.subr.mxu0 0.0
  %692 = vmatpush1.msra.mxu0 %v467
  %693 = vmatprep.subr.mxu0 0.0
  %694 = vmatpush1.msra.mxu0 %v466
  %695 = vmatprep.subr.mxu0 0.0
  %696 = vmatpush1.msra.mxu0 %v465
  %697 = vmatprep.subr.mxu0 0.0
  %698 = vmatpush1.msra.mxu0 %v464
  %699 = vmatprep.subr.mxu0 0.0
  %700 = vmatpush1.msra.mxu0 %v463
  %701 = vmatprep.subr.mxu0 0.0
  %702 = vmatpush1.msra.mxu0 %v462
  %703 = vmatprep.subr.mxu0 0.0
  %704 = vmatpush1.msra.mxu0 %v461
  %705 = vmatprep.subr.mxu0 0.0
  %706 = vmatpush1.msra.mxu0 %v460
  %707 = vmatprep.subr.mxu0 0.0
  %708 = vmatpush1.msra.mxu0 %v459
  %709 = vmatprep.subr.mxu0 0.0
  %710 = vmatpush1.msra.mxu0 %v458
  %711 = vmatprep.subr.mxu0 0.0
  %712 = vmatpush1.msra.mxu0 %v457
  %713 = vmatprep.subr.mxu0 0.0
  %714 = vmatpush1.msra.mxu0 %v456
  %715 = vmatprep.subr.mxu0 0.0
  %716 = vmatpush1.msra.mxu0 %v455
  %717 = vmatprep.subr.mxu0 0.0
  %718 = vmatpush1.msra.mxu0 %v454
  %719 = vmatprep.subr.mxu0 0.0
  %720 = vmatpush2.msra.mxu0 0.0
  %721 = vmatprep.subr.mxu0 0.0
  %722 = vmatpush2.msra.mxu0 0.0
  %723 = vmatprep.subr.mxu0 0.0
  %724 = vmatpush2.msra.mxu0 0.0
  %725 = vmatprep.subr.mxu0 0.0
  %726 = vmatpush2.msra.mxu0 0.0
  %727 = vmatprep.subr.mxu0 0.0
  %728 = vmatpush2.msra.mxu0 0.0
  %729 = vmatprep.subr.mxu0 0.0
  %730 = vmatpush2.msra.mxu0 0.0
  %731 = vmatprep.subr.mxu0 0.0
  %732 = vmatpush2.msra.mxu0 0.0
  %733 = vmatprep.subr.mxu0 0.0
  %734 = vmatpush2.msra.mxu0 0.0
  %735 = vmatprep.subr.mxu0 0.0
  %736 = vmatpush2.msra.mxu0 0.0
  %737 = vmatprep.subr.mxu0 0.0
  %738 = vmatpush2.msra.mxu0 0.0
  %739 = vmatprep.subr.mxu0 0.0
  %740 = vmatpush2.msra.mxu0 0.0
  %741 = vmatprep.subr.mxu0 0.0
  %742 = vmatpush2.msra.mxu0 0.0
  %743 = vmatprep.subr.mxu0 0.0
  %744 = vmatpush2.msra.mxu0 0.0
  %745 = vmatprep.subr.mxu0 0.0
  %746 = vmatpush2.msra.mxu0 0.0
  %747 = vmatprep.subr.mxu0 0.0
  %748 = vmatpush2.msra.mxu0 0.0
  %749 = vmatprep.subr.mxu0 0.0
  %750 = vmatpush2.msra.mxu0 0.0
  %751 = vmatprep.mubr.f32.mxu0 0.0
  %752 = vmatmul.mubr.f32.gmra.mxu0 %v357
  %v753 = vpop.f32.mrf.mxu0
  %v754 = vadd.f32 %v684, %v753
  %v755 = vpop.f32.mrf.mxu0
  %756 = vdwg.mxu0
  %v757 = vmax.f32 %v754, 0.0
  %v758 = vld [vmem:[%s5] sm:$0xff]
  %v759 = vld [vmem:[%s5 + $0x8] sm:$0xff]
  %v760 = vld [vmem:[%s5 + $0x10] sm:$0xff]
  %v761 = vld [vmem:[%s5 + $0x18] sm:$0xff]
  %v762 = vld [vmem:[%s5 + $0x20] sm:$0xff]
  %v763 = vld [vmem:[%s5 + $0x28] sm:$0xff]
  %v764 = vld [vmem:[%s5 + $0x30] sm:$0xff]
  %v765 = vld [vmem:[%s5 + $0x38] sm:$0xff]
  %v766 = vld [vmem:[%s5 + $0x40] sm:$0xff]
  %v767 = vld [vmem:[%s5 + $0x48] sm:$0xff]
  %v768 = vld [vmem:[%s5 + $0x50] sm:$0xff]
  %v769 = vld [vmem:[%s5 + $0x58] sm:$0xff]
  %v770 = vld [vmem:[%s5 + $0x60] sm:$0xff]
  %v771 = vld [vmem:[%s5 + $0x68] sm:$0xff]
  %v772 = vld [vmem:[%s5 + $0x70] sm:$0xff]
  %v773 = vld [vmem:[%s5 + $0x78] sm:$0xff]
  %v774 = vld [vmem:[%s6] sm:$0x1]
  %v776 = vlaneseq
  %v777 = vshrl.u32 %v776, 7
  %v778 = vsub.s32 0, %v777
  %v779 = vrot.slane %v774, %v778
  %781 = vmatprep.subr.mxu0 0.0
  %782 = vmatpush1.msra.mxu0 %v773
  %783 = vmatprep.subr.mxu0 0.0
  %784 = vmatpush1.msra.mxu0 %v772
  %785 = vmatprep.subr.mxu0 0.0
  %786 = vmatpush1.msra.mxu0 %v771
  %787 = vmatprep.subr.mxu0 0.0
  %788 = vmatpush1.msra.mxu0 %v770
  %789 = vmatprep.subr.mxu0 0.0
  %790 = vmatpush1.msra.mxu0 %v769
  %791 = vmatprep.subr.mxu0 0.0
  %792 = vmatpush1.msra.mxu0 %v768
  %793 = vmatprep.subr.mxu0 0.0
  %794 = vmatpush1.msra.mxu0 %v767
  %795 = vmatprep.subr.mxu0 0.0
  %796 = vmatpush1.msra.mxu0 %v766
  %797 = vmatprep.subr.mxu0 0.0
  %798 = vmatpush1.msra.mxu0 %v765
  %799 = vmatprep.subr.mxu0 0.0
  %800 = vmatpush1.msra.mxu0 %v764
  %801 = vmatprep.subr.mxu0 0.0
  %802 = vmatpush1.msra.mxu0 %v763
  %803 = vmatprep.subr.mxu0 0.0
  %804 = vmatpush1.msra.mxu0 %v762
  %805 = vmatprep.subr.mxu0 0.0
  %806 = vmatpush1.msra.mxu0 %v761
  %807 = vmatprep.subr.mxu0 0.0
  %808 = vmatpush1.msra.mxu0 %v760
  %809 = vmatprep.subr.mxu0 0.0
  %810 = vmatpush1.msra.mxu0 %v759
  %811 = vmatprep.subr.mxu0 0.0
  %812 = vmatpush1.msra.mxu0 %v758
  %813 = vmatprep.subr.mxu0 0.0
  %814 = vmatpush2.msra.mxu0 0.0
  %815 = vmatprep.subr.mxu0 0.0
  %816 = vmatpush2.msra.mxu0 0.0
  %817 = vmatprep.subr.mxu0 0.0
  %818 = vmatpush2.msra.mxu0 0.0
  %819 = vmatprep.subr.mxu0 0.0
  %820 = vmatpush2.msra.mxu0 0.0
  %821 = vmatprep.subr.mxu0 0.0
  %822 = vmatpush2.msra.mxu0 0.0
  %823 = vmatprep.subr.mxu0 0.0
  %824 = vmatpush2.msra.mxu0 0.0
  %825 = vmatprep.subr.mxu0 0.0
  %826 = vmatpush2.msra.mxu0 0.0
  %827 = vmatprep.subr.mxu0 0.0
  %828 = vmatpush2.msra.mxu0 0.0
  %829 = vmatprep.subr.mxu0 0.0
  %830 = vmatpush2.msra.mxu0 0.0
  %831 = vmatprep.subr.mxu0 0.0
  %832 = vmatpush2.msra.mxu0 0.0
  %833 = vmatprep.subr.mxu0 0.0
  %834 = vmatpush2.msra.mxu0 0.0
  %835 = vmatprep.subr.mxu0 0.0
  %836 = vmatpush2.msra.mxu0 0.0
  %837 = vmatprep.subr.mxu0 0.0
  %838 = vmatpush2.msra.mxu0 0.0
  %839 = vmatprep.subr.mxu0 0.0
  %840 = vmatpush2.msra.mxu0 0.0
  %841 = vmatprep.subr.mxu0 0.0
  %842 = vmatpush2.msra.mxu0 0.0
  %843 = vmatprep.subr.mxu0 0.0
  %844 = vmatpush2.msra.mxu0 0.0
  %845 = vmatprep.mubr.f32.mxu0 0.0
  %846 = vmatmul.mubr.f32.gmra.mxu0 %v757
  %v847 = vpop.f32.mrf.mxu0
  %v848 = vadd.f32 %v779, %v847
  %v849 = vpop.f32.mrf.mxu0
  %850 = vdwg.mxu0
  %851 = vmax.xlane.f32.xlu0 %v848
  %v852 = vpop.xlane.xlu0 %851
  %v853 = vsub.f32 %v848, %v852
  %v854 = vmul.f32 %v853, 1.442695
  %v855 = vpow.pop %v854
  %856 = vadd.xlane.f32.xlu0 %v855
  %v857 = vpop.xlane.xlu0 %856
  %v858 = vrcp.pop %v857
  %v859 = vmul.f32 %v857, %v858
  %v860 = vsub.f32 2.0, %v859
  %v861 = vmul.f32 %v858, %v860
  %v862 = vmul.f32 %v855, %v861
  %863 = vst [vmem:[%s7] sm:$0xff] %v862
  // Predicated region
  $region30: #{_lambda_.1} parent=0 // pred_check
    _
  $region31: #{_lambda_.1} parent=0 // pred_check_branch
    %865 = sbr.rel (0) target = $region33
  $region32: #{_lambda_.1} parent=0 // pred_region
    _
  $region33: #{_lambda_.1} parent=0 // pred_fallthru
    _
  // Predicated region
  $region34: #{_lambda_.1} parent=0 // pred_check
    _
  $region35: #{_lambda_.1} parent=0 // pred_check_branch
    %867 = sbr.rel (0) target = $region37
  $region36: #{_lambda_.1} parent=0 // pred_region
    _
  $region37: #{_lambda_.1} parent=0 // pred_fallthru
    _

</llo_original>
